<compile_context>
chip_gen: v5e
topology: v5e:2x2
jax: 0.10.0
libtpu: 0.0.40
codegen_flags: <defaults>
</compile_context>

<pallas_src>
import jax
import jax.numpy as jnp
from jax.experimental import pallas as pl
from jax.experimental.pallas import tpu as pltpu

IN_DIM = 256
HID_DIM = 64
OUT_DIM = 1
HID_PAD = 128   # lane-dense padded hidden width
OUT_PAD = 128   # lane-dense padded output width


def _round_up(x, m):
    return ((x + m - 1) // m) * m


def _center_net_kernel(x_ref, w1_ref, b1_ref, w2_ref, b2_ref, o_ref):
    # fc1: (TM, 256) bf16 @ (256, 128) bf16 -> f32 accum, + bias, LeakyReLU(0.2)
    h = jnp.dot(x_ref[...], w1_ref[...], preferred_element_type=jnp.float32)
    h = h + b1_ref[...]
    h = jnp.where(h >= 0.0, h, 0.2 * h)
    # dropout(p=0.5): identity in eval mode (no scaling at inference)
    # TODO(synk): train-mode dropout (random masking) not implemented.
    # fc2: (TM, 128) bf16 @ (128, 128) bf16 -> f32 accum, + bias, sigmoid
    out = jnp.dot(h.astype(jnp.bfloat16), w2_ref[...],
                  preferred_element_type=jnp.float32)
    out = out + b2_ref[...]
    o_ref[...] = jax.nn.sigmoid(out).astype(o_ref.dtype)


def center_net_forward(point_features, w1, b1, w2, b2, *, tm=1024):
    """point_features: (N, 256) float32.
    w1: (256, 64), b1: (64,), w2: (64, 1), b2: (1,).
    Returns (N, 1) float32 = sigmoid(fc2(leaky_relu(fc1(x), 0.2)))."""
    n = point_features.shape[0]

    # Zero-pad hidden/output dims to 128 lanes (bf16 weights, f32 biases).
    w1_p = jnp.zeros((IN_DIM, HID_PAD), jnp.bfloat16)
    w1_p = w1_p.at[:, :HID_DIM].set(w1.astype(jnp.bfloat16))
    b1_p = jnp.zeros((1, HID_PAD), jnp.float32).at[:, :HID_DIM].set(
        b1.reshape(1, HID_DIM).astype(jnp.float32))
    w2_p = jnp.zeros((HID_PAD, OUT_PAD), jnp.bfloat16)
    w2_p = w2_p.at[:HID_DIM, :OUT_DIM].set(w2.astype(jnp.bfloat16))
    b2_p = jnp.zeros((1, OUT_PAD), jnp.float32).at[:, :OUT_DIM].set(
        b2.reshape(1, OUT_DIM).astype(jnp.float32))

    # Row tile: large by default, clamped for small inputs; pad N to a multiple.
    tm_eff = min(int(tm), _round_up(max(n, 1), 8))
    n_pad = _round_up(n, tm_eff)
    x = point_features.astype(jnp.bfloat16)
    if n_pad != n:
        x = jnp.pad(x, ((0, n_pad - n), (0, 0)))

    out_padded = pl.pallas_call(
        _center_net_kernel,
        out_shape=jax.ShapeDtypeStruct((n_pad, OUT_PAD), jnp.float32),
        grid=(n_pad // tm_eff,),
        in_specs=[
            pl.BlockSpec((tm_eff, IN_DIM), lambda i: (i, 0)),
            pl.BlockSpec((IN_DIM, HID_PAD), lambda i: (0, 0)),
            pl.BlockSpec((1, HID_PAD), lambda i: (0, 0)),
            pl.BlockSpec((HID_PAD, OUT_PAD), lambda i: (0, 0)),
            pl.BlockSpec((1, OUT_PAD), lambda i: (0, 0)),
        ],
        out_specs=pl.BlockSpec((tm_eff, OUT_PAD), lambda i: (i, 0)),
        compiler_params=pltpu.CompilerParams(
            dimension_semantics=("parallel",),
        ),
    )(x, w1_p, b1_p, w2_p, b2_p)

    return out_padded[:n, :OUT_DIM]


def _reference(point_features, w1, b1, w2, b2):
    h = point_features @ w1 + b1
    h = jnp.where(h >= 0.0, h, 0.2 * h)
    return jax.nn.sigmoid(h @ w2 + b2)


if __name__ == "__main__":
    key = jax.random.PRNGKey(0)
    k_x, k_w1, k_b1, k_w2, k_b2 = jax.random.split(key, 5)

    N = 16  # number of points (small test size, arbitrary N supported)
    x = jax.random.normal(k_x, (N, IN_DIM), dtype=jnp.float32)

    # Deterministic parameter init (PyTorch-style uniform bounds, synthetic).
    bound1 = 1.0 / jnp.sqrt(IN_DIM)
    w1 = jax.random.uniform(k_w1, (IN_DIM, HID_DIM), jnp.float32, -bound1, bound1)
    b1 = jax.random.uniform(k_b1, (HID_DIM,), jnp.float32, -bound1, bound1)
    bound2 = 1.0 / jnp.sqrt(HID_DIM)
    w2 = jax.random.uniform(k_w2, (HID_DIM, OUT_DIM), jnp.float32, -bound2, bound2)
    b2 = jax.random.uniform(k_b2, (OUT_DIM,), jnp.float32, -bound2, bound2)

    out = center_net_forward(x, w1, b1, w2, b2)
    out = jax.block_until_ready(out)

    ref = _reference(x, w1, b1, w2, b2)
    assert out.shape == (N, OUT_DIM)
    # bf16 MXU inputs with f32 accumulation -> widen tolerance vs f32 reference.
    assert jnp.allclose(out, ref, atol=2e-2, rtol=2e-2), "mismatch vs reference"
    print("KERNEL_OK")
</pallas_src>

<mosaic_0001>
module attributes {stable_mosaic.version = 11 : i64} {
  func.func @_center_net_kernel(%arg0: i32, %arg1: memref<16x256xbf16, #tpu.memory_space<vmem>>, %arg2: memref<256x128xbf16, #tpu.memory_space<vmem>>, %arg3: memref<1x128xf32, #tpu.memory_space<vmem>>, %arg4: memref<128x128xbf16, #tpu.memory_space<vmem>>, %arg5: memref<1x128xf32, #tpu.memory_space<vmem>>, %arg6: memref<16x128xf32, #tpu.memory_space<vmem>>) attributes {dimension_semantics = [#tpu.dimension_semantics<parallel>], iteration_bounds = array<i64: 1>, scalar_prefetch = 0 : i64, scratch_operands = 0 : i64, tpu.core_type = #tpu.core_type<tc>, window_params = [{transform_indices = @transform_0, window_bounds = array<i64: 16, 256>}, {pipeline_mode = #tpu.pipeline_mode<synchronous>, transform_indices = @transform_1, window_bounds = array<i64: 256, 128>}, {pipeline_mode = #tpu.pipeline_mode<synchronous>, transform_indices = @transform_2, window_bounds = array<i64: 1, 128>}, {pipeline_mode = #tpu.pipeline_mode<synchronous>, transform_indices = @transform_3, window_bounds = array<i64: 128, 128>}, {pipeline_mode = #tpu.pipeline_mode<synchronous>, transform_indices = @transform_4, window_bounds = array<i64: 1, 128>}, {transform_indices = @transform_5, window_bounds = array<i64: 16, 128>}]} {
    %c0 = arith.constant 0 : index
    %c0_0 = arith.constant 0 : index
    %0 = vector.load %arg1[%c0, %c0_0] : memref<16x256xbf16, #tpu.memory_space<vmem>>, vector<16x256xbf16>
    %c0_1 = arith.constant 0 : index
    %c0_2 = arith.constant 0 : index
    %1 = vector.load %arg2[%c0_1, %c0_2] : memref<256x128xbf16, #tpu.memory_space<vmem>>, vector<256x128xbf16>
    %cst = arith.constant dense<0.000000e+00> : vector<16x128xf32>
    %2 = tpu.matmul %0, %1, %cst {dimension_numbers = #tpu.dot_dimension_numbers<[1], [0], [0], [1], [0, 0, 1, 1], [], []>} : vector<16x256xbf16>, vector<256x128xbf16>, vector<16x128xf32> -> vector<16x128xf32>
    %c0_3 = arith.constant 0 : index
    %c0_4 = arith.constant 0 : index
    %3 = vector.load %arg3[%c0_3, %c0_4] : memref<1x128xf32, #tpu.memory_space<vmem>>, vector<1x128xf32>
    %4 = vector.broadcast %3 : vector<1x128xf32> to vector<16x128xf32>
    %5 = arith.addf %2, %4 : vector<16x128xf32>
    %cst_5 = arith.constant 0.000000e+00 : f32
    %6 = vector.broadcast %cst_5 : f32 to vector<16x128xf32>
    %7 = arith.cmpf oge, %5, %6 : vector<16x128xf32>
    %cst_6 = arith.constant 2.000000e-01 : f32
    %8 = vector.broadcast %cst_6 : f32 to vector<16x128xf32>
    %9 = arith.mulf %8, %5 : vector<16x128xf32>
    %10 = arith.select %7, %5, %9 : vector<16x128xi1>, vector<16x128xf32>
    %11 = arith.truncf %10 : vector<16x128xf32> to vector<16x128xbf16>
    %c0_7 = arith.constant 0 : index
    %c0_8 = arith.constant 0 : index
    %12 = vector.load %arg4[%c0_7, %c0_8] : memref<128x128xbf16, #tpu.memory_space<vmem>>, vector<128x128xbf16>
    %cst_9 = arith.constant dense<0.000000e+00> : vector<16x128xf32>
    %13 = tpu.matmul %11, %12, %cst_9 {dimension_numbers = #tpu.dot_dimension_numbers<[1], [0], [0], [1], [0, 0, 1, 1], [], []>} : vector<16x128xbf16>, vector<128x128xbf16>, vector<16x128xf32> -> vector<16x128xf32>
    %c0_10 = arith.constant 0 : index
    %c0_11 = arith.constant 0 : index
    %14 = vector.load %arg5[%c0_10, %c0_11] : memref<1x128xf32, #tpu.memory_space<vmem>>, vector<1x128xf32>
    %15 = vector.broadcast %14 : vector<1x128xf32> to vector<16x128xf32>
    %16 = arith.addf %13, %15 : vector<16x128xf32>
    %17 = arith.negf %16 : vector<16x128xf32>
    %18 = math.exp %17 : vector<16x128xf32>
    %cst_12 = arith.constant 1.000000e+00 : f32
    %19 = vector.broadcast %cst_12 : f32 to vector<16x128xf32>
    %20 = arith.addf %19, %18 : vector<16x128xf32>
    %21 = arith.divf %19, %20 : vector<16x128xf32>
    %c0_13 = arith.constant 0 : index
    %c0_14 = arith.constant 0 : index
    %22 = vector.load %arg6[%c0_13, %c0_14] : memref<16x128xf32, #tpu.memory_space<vmem>>, vector<16x128xf32>
    tpu.vector_store %arg6[%c0_13, %c0_14], %21 {strides = array<i32>} : memref<16x128xf32, #tpu.memory_space<vmem>>, vector<16x128xf32>,
    return
  }
  func.func @transform_0(%arg0: i32) -> (i32, i32) {
    %c0_i32 = arith.constant 0 : i32
    %c0_i32_0 = arith.constant 0 : i32
    return %arg0, %c0_i32 : i32, i32
  }
  func.func @transform_1(%arg0: i32) -> (i32, i32) {
    %c0_i32 = arith.constant 0 : i32
    %c0_i32_0 = arith.constant 0 : i32
    %c0_i32_1 = arith.constant 0 : i32
    return %c0_i32, %c0_i32_0 : i32, i32
  }
  func.func @transform_2(%arg0: i32) -> (i32, i32) {
    %c0_i32 = arith.constant 0 : i32
    %c0_i32_0 = arith.constant 0 : i32
    %c0_i32_1 = arith.constant 0 : i32
    return %c0_i32, %c0_i32_0 : i32, i32
  }
  func.func @transform_3(%arg0: i32) -> (i32, i32) {
    %c0_i32 = arith.constant 0 : i32
    %c0_i32_0 = arith.constant 0 : i32
    %c0_i32_1 = arith.constant 0 : i32
    return %c0_i32, %c0_i32_0 : i32, i32
  }
  func.func @transform_4(%arg0: i32) -> (i32, i32) {
    %c0_i32 = arith.constant 0 : i32
    %c0_i32_0 = arith.constant 0 : i32
    %c0_i32_1 = arith.constant 0 : i32
    return %c0_i32, %c0_i32_0 : i32, i32
  }
  func.func @transform_5(%arg0: i32) -> (i32, i32) {
    %c0_i32 = arith.constant 0 : i32
    %c0_i32_0 = arith.constant 0 : i32
    return %arg0, %c0_i32 : i32, i32
  }
}

</mosaic_0001>

<llo_original>
// kernel: tpu_custom_call.1
$region0: #{tpu_custom_call.1}
  #allocation0 [shape = 'u32[]', space=smem, size = 0x4, offset = 0x4, fixed_abs, tag = 'smem constant byte address 0x4 - core index']
  #allocation1 [shape = 'u32[72,128]{1,0:T(1,128)}', space=vmem, size = 0x9000, scoped, tag = 'internal scratch']
  %s0 = inlined_call_operand.hbm [shape: bf16[16,256], index: 0, kind: input, shape index: {}]
  %s1 = inlined_call_operand.hbm [shape: bf16[256,128], index: 1, kind: input, shape index: {}]
  %s2 = inlined_call_operand.vmem [shape: f32[1,128], index: 2, kind: input, shape index: {}]
  %s3 = inlined_call_operand.hbm [shape: bf16[128,128], index: 3, kind: input, shape index: {}]
  %s4 = inlined_call_operand.vmem [shape: f32[1,128], index: 4, kind: input, shape index: {}]
  %s5 = inlined_call_operand.hbm [shape: f32[16,128], index: 5, kind: output, shape index: {}]
  %s6 = sld [smem:[#allocation0]]
  $region42: #{tpu_custom_call.1} parent=0
    _
  %s8 = ssub.s32 1, %s6
  %s9 = scalar_select 0, %s8, %s6
  $region1: #{tpu_custom_call.1} parent=0
    #allocation2 [shape = 'u8[8192]{0}', space=vmem, size = 0x2000, scoped, tag = 'input window, operand 0, single buffered']
    #allocation3 [shape = 's32[1]{0}', space=sflag, size = 0x4, scoped, tag = 'scoped memory for tpu_custom_call.1']
    #allocation4 [shape = 's32[1]{0}', space=sflag, size = 0x4, scoped, tag = 'scoped memory for tpu_custom_call.1']
    #allocation5 [shape = 'u8[65536]{0}', space=vmem, size = 0x10000, scoped, tag = 'input window, operand 1, single buffered']
    #allocation6 [shape = 's32[1]{0}', space=sflag, size = 0x4, scoped, tag = 'scoped memory for tpu_custom_call.1']
    #allocation7 [shape = 'u8[32768]{0}', space=vmem, size = 0x8000, scoped, tag = 'input window, operand 3, single buffered']
    #allocation8 [shape = 'u8[8192]{0}', space=vmem, size = 0x2000, scoped, tag = 'output window, operand 0, single buffered']
    %10 = vsyncpa [#allocation3], 0
    %11 = vsyncpa [#allocation6], 0
    %12 = vsyncpa [#allocation4], 0
    // Predicated region
    $region2: #{tpu_custom_call.1} parent=1 // pred_check
      _
    $region3: #{tpu_custom_call.1} parent=1 // pred_check_branch
      %14 = sbr.rel (0) target = $region5
    $region4: #{tpu_custom_call.1} parent=1 // pred_region
      %16 = vsyncadd [#allocation3], 0
      %s17 = sshll.u32 %s0, 4
      %s18 = int_to_ptr.hbm [resolvable:$true] %s17
      %s19 = sshll.u32 [#allocation2], 4
      %s20 = int_to_ptr.vmem [resolvable:$true] %s19
      %25 = dma.hbm_to_vmem [thread:$0]  %s18, 256, %s20, [#allocation3], 128, 128, 8
    $region5: #{tpu_custom_call.1} parent=1 // pred_fallthru
      _
    // Predicated region
    $region6: #{tpu_custom_call.1} parent=1 // pred_check
      _
    $region7: #{tpu_custom_call.1} parent=1 // pred_check_branch
      %27 = sbr.rel (0) target = $region9
    $region8: #{tpu_custom_call.1} parent=1 // pred_region
      %29 = vsyncadd [#allocation6], 0
      %s30 = sshll.u32 %s1, 4
      %s31 = int_to_ptr.hbm [resolvable:$true] %s30
      %s32 = sshll.u32 [#allocation5], 4
      %s33 = int_to_ptr.vmem [resolvable:$true] %s32
      %38 = dma.hbm_to_vmem [thread:$0]  %s31, 2048, %s33, [#allocation6], 64, 64, 4
    $region9: #{tpu_custom_call.1} parent=1 // pred_fallthru
      _
    // Predicated region
    $region10: #{tpu_custom_call.1} parent=1 // pred_check
      _
    $region11: #{tpu_custom_call.1} parent=1 // pred_check_branch
      %40 = sbr.rel (0) target = $region13
    $region12: #{tpu_custom_call.1} parent=1 // pred_region
      _
    $region13: #{tpu_custom_call.1} parent=1 // pred_fallthru
      _
    // Predicated region
    $region14: #{tpu_custom_call.1} parent=1 // pred_check
      _
    $region15: #{tpu_custom_call.1} parent=1 // pred_check_branch
      %42 = sbr.rel (0) target = $region17
    $region16: #{tpu_custom_call.1} parent=1 // pred_region
      %44 = vsyncadd [#allocation6], 0
      %s45 = sshll.u32 %s3, 4
      %s46 = int_to_ptr.hbm [resolvable:$true] %s45
      %s47 = sshll.u32 [#allocation7], 4
      %s48 = int_to_ptr.vmem [resolvable:$true] %s47
      %53 = dma.hbm_to_vmem [thread:$0]  %s46, 1024, %s48, [#allocation6], 64, 64, 4
    $region17: #{tpu_custom_call.1} parent=1 // pred_fallthru
      _
    // Predicated region
    $region18: #{tpu_custom_call.1} parent=1 // pred_check
      _
    $region19: #{tpu_custom_call.1} parent=1 // pred_check_branch
      %55 = sbr.rel (0) target = $region21
    $region20: #{tpu_custom_call.1} parent=1 // pred_region
      _
    $region21: #{tpu_custom_call.1} parent=1 // pred_fallthru
      _
    // Predicated region
    $region22: #{tpu_custom_call.1} parent=1 // pred_check
      _
    $region23: #{tpu_custom_call.1} parent=1 // pred_check_branch
      %57 = sbr.rel (0) target = $region25
    $region24: #{tpu_custom_call.1} parent=1 // pred_region
      %59 = dma.done [#allocation3], 256
    $region25: #{tpu_custom_call.1} parent=1 // pred_fallthru
      _
    // Predicated region
    $region26: #{tpu_custom_call.1} parent=1 // pred_check
      _
    $region27: #{tpu_custom_call.1} parent=1 // pred_check_branch
      %61 = sbr.rel (0) target = $region29
    $region28: #{tpu_custom_call.1} parent=1 // pred_region
      %63 = dma.done [#allocation6], 2048
    $region29: #{tpu_custom_call.1} parent=1 // pred_fallthru
      _
    // Predicated region
    $region30: #{tpu_custom_call.1} parent=1 // pred_check
      _
    $region31: #{tpu_custom_call.1} parent=1 // pred_check_branch
      %65 = sbr.rel (0) target = $region33
    $region32: #{tpu_custom_call.1} parent=1 // pred_region
      %67 = dma.done [#allocation6], 1024
    $region33: #{tpu_custom_call.1} parent=1 // pred_fallthru
      _
    %v68 = vld [vmem:[#allocation2] sm:$0xff]
    %v69 = vld [vmem:[#allocation2 + $0x8] sm:$0xff]
    %v70 = vld [vmem:[#allocation5] sm:$0xf]
    %v71 = vld [vmem:[#allocation5 + $0x4] sm:$0xf]
    %v72 = vld [vmem:[#allocation5 + $0x8] sm:$0xf]
    %v73 = vld [vmem:[#allocation5 + $0xc] sm:$0xf]
    %v74 = vld [vmem:[#allocation5 + $0x10] sm:$0xf]
    %v75 = vld [vmem:[#allocation5 + $0x14] sm:$0xf]
    %v76 = vld [vmem:[#allocation5 + $0x18] sm:$0xf]
    %v77 = vld [vmem:[#allocation5 + $0x1c] sm:$0xf]
    %v78 = vld [vmem:[#allocation5 + $0x20] sm:$0xf]
    %v79 = vld [vmem:[#allocation5 + $0x24] sm:$0xf]
    %v80 = vld [vmem:[#allocation5 + $0x28] sm:$0xf]
    %v81 = vld [vmem:[#allocation5 + $0x2c] sm:$0xf]
    %v82 = vld [vmem:[#allocation5 + $0x30] sm:$0xf]
    %v83 = vld [vmem:[#allocation5 + $0x34] sm:$0xf]
    %v84 = vld [vmem:[#allocation5 + $0x38] sm:$0xf]
    %v85 = vld [vmem:[#allocation5 + $0x3c] sm:$0xf]
    %v86 = vld [vmem:[#allocation5 + $0x40] sm:$0xf]
    %v87 = vld [vmem:[#allocation5 + $0x44] sm:$0xf]
    %v88 = vld [vmem:[#allocation5 + $0x48] sm:$0xf]
    %v89 = vld [vmem:[#allocation5 + $0x4c] sm:$0xf]
    %v90 = vld [vmem:[#allocation5 + $0x50] sm:$0xf]
    %v91 = vld [vmem:[#allocation5 + $0x54] sm:$0xf]
    %v92 = vld [vmem:[#allocation5 + $0x58] sm:$0xf]
    %v93 = vld [vmem:[#allocation5 + $0x5c] sm:$0xf]
    %v94 = vld [vmem:[#allocation5 + $0x60] sm:$0xf]
    %v95 = vld [vmem:[#allocation5 + $0x64] sm:$0xf]
    %v96 = vld [vmem:[#allocation5 + $0x68] sm:$0xf]
    %v97 = vld [vmem:[#allocation5 + $0x6c] sm:$0xf]
    %v98 = vld [vmem:[#allocation5 + $0x70] sm:$0xf]
    %v99 = vld [vmem:[#allocation5 + $0x74] sm:$0xf]
    %v100 = vld [vmem:[#allocation5 + $0x78] sm:$0xf]
    %v101 = vld [vmem:[#allocation5 + $0x7c] sm:$0xf]
    %v102 = vld [vmem:[%s2] sm:$0x1]
    %v104 = vperm.slane %v102, 0
    %v108 = vunpack.c.l.b16 %v68
    %v109 = vunpack.c.h.b16 %v68
    %v110 = vunpack.c.l.b16 %v69
    %v111 = vunpack.c.h.b16 %v69
    %v112 = vpack.c.b16 %v110, %v108
    %v113 = vpack.c.b16 %v111, %v109
    %v148 = vunpack.c.l.b16 %v70
    %v149 = vunpack.c.l.b16 %v71
    %v150 = vunpack.c.l.b16 %v72
    %v151 = vunpack.c.l.b16 %v73
    %v152 = vunpack.c.l.b16 %v74
    %v153 = vunpack.c.l.b16 %v75
    %v154 = vunpack.c.l.b16 %v76
    %v155 = vunpack.c.l.b16 %v77
    %v156 = vunpack.c.l.b16 %v78
    %v157 = vunpack.c.l.b16 %v79
    %v158 = vunpack.c.l.b16 %v80
    %v159 = vunpack.c.l.b16 %v81
    %v160 = vunpack.c.l.b16 %v82
    %v161 = vunpack.c.l.b16 %v83
    %v162 = vunpack.c.l.b16 %v84
    %v163 = vunpack.c.l.b16 %v85
    %v164 = vunpack.c.l.b16 %v86
    %v165 = vunpack.c.l.b16 %v87
    %v166 = vunpack.c.l.b16 %v88
    %v167 = vunpack.c.l.b16 %v89
    %v168 = vunpack.c.l.b16 %v90
    %v169 = vunpack.c.l.b16 %v91
    %v170 = vunpack.c.l.b16 %v92
    %v171 = vunpack.c.l.b16 %v93
    %v172 = vunpack.c.l.b16 %v94
    %v173 = vunpack.c.l.b16 %v95
    %v174 = vunpack.c.l.b16 %v96
    %v175 = vunpack.c.l.b16 %v97
    %v176 = vunpack.c.l.b16 %v98
    %v177 = vunpack.c.l.b16 %v99
    %v178 = vunpack.c.l.b16 %v100
    %v179 = vunpack.c.l.b16 %v101
    %v180 = vpack.c.b16 %v149, %v148
    %v181 = vpack.c.b16 %v151, %v150
    %v182 = vpack.c.b16 %v153, %v152
    %v183 = vpack.c.b16 %v155, %v154
    %v184 = vpack.c.b16 %v157, %v156
    %v185 = vpack.c.b16 %v159, %v158
    %v186 = vpack.c.b16 %v161, %v160
    %v187 = vpack.c.b16 %v163, %v162
    %v188 = vpack.c.b16 %v165, %v164
    %v189 = vpack.c.b16 %v167, %v166
    %v190 = vpack.c.b16 %v169, %v168
    %v191 = vpack.c.b16 %v171, %v170
    %v192 = vpack.c.b16 %v173, %v172
    %v193 = vpack.c.b16 %v175, %v174
    %v194 = vpack.c.b16 %v177, %v176
    %v195 = vpack.c.b16 %v179, %v178
    %212 = vmatpush.bf16.msra.mxu0 %v187
    %213 = vmatpush.bf16.msra.mxu0 %v186
    %214 = vmatpush.bf16.msra.mxu0 %v185
    %215 = vmatpush.bf16.msra.mxu0 %v184
    %216 = vmatpush.bf16.msra.mxu0 %v183
    %217 = vmatpush.bf16.msra.mxu0 %v182
    %218 = vmatpush.bf16.msra.mxu0 %v181
    %219 = vmatpush.bf16.msra.mxu0 %v180
    %220 = vmatmul.bf16.gmra.mxu0 %v112
    %v221 = vpop.f32.mrf.mxu0
    %v222 = vadd.f32 %v104, %v221
    %v223 = vpop.f32.mrf.mxu0
    %v224 = vadd.f32 %v104, %v223
    %225 = vdwg.mxu0
    %226 = vmatpush.bf16.msra.mxu0 %v195
    %227 = vmatpush.bf16.msra.mxu0 %v194
    %228 = vmatpush.bf16.msra.mxu0 %v193
    %229 = vmatpush.bf16.msra.mxu0 %v192
    %230 = vmatpush.bf16.msra.mxu0 %v191
    %231 = vmatpush.bf16.msra.mxu0 %v190
    %232 = vmatpush.bf16.msra.mxu0 %v189
    %233 = vmatpush.bf16.msra.mxu0 %v188
    %234 = vmatmul.bf16.gmra.mxu0 %v113
    %v235 = vpop.f32.mrf.mxu0
    %v236 = vadd.f32 %v222, %v235
    %v237 = vpop.f32.mrf.mxu0
    %v238 = vadd.f32 %v224, %v237
    %239 = vdwg.mxu0
    %vm240 = vcmp.ge.f32.partialorder %v236, 0.0
    %vm241 = vcmp.ge.f32.partialorder %v238, 0.0
    %v242 = vmul.f32 %v236, 0.2
    %v243 = vmul.f32 %v238, 0.2
    %v244 = vsel %vm240, %v236, %v242
    %v245 = vsel %vm241, %v238, %v243
    %v246 = vpack.c.bf16 %v245, %v244
    %v247 = vld [vmem:[#allocation7] sm:$0xf]
    %v248 = vld [vmem:[#allocation7 + $0x4] sm:$0xf]
    %v249 = vld [vmem:[#allocation7 + $0x8] sm:$0xf]
    %v250 = vld [vmem:[#allocation7 + $0xc] sm:$0xf]
    %v251 = vld [vmem:[#allocation7 + $0x10] sm:$0xf]
    %v252 = vld [vmem:[#allocation7 + $0x14] sm:$0xf]
    %v253 = vld [vmem:[#allocation7 + $0x18] sm:$0xf]
    %v254 = vld [vmem:[#allocation7 + $0x1c] sm:$0xf]
    %v255 = vld [vmem:[#allocation7 + $0x20] sm:$0xf]
    %v256 = vld [vmem:[#allocation7 + $0x24] sm:$0xf]
    %v257 = vld [vmem:[#allocation7 + $0x28] sm:$0xf]
    %v258 = vld [vmem:[#allocation7 + $0x2c] sm:$0xf]
    %v259 = vld [vmem:[#allocation7 + $0x30] sm:$0xf]
    %v260 = vld [vmem:[#allocation7 + $0x34] sm:$0xf]
    %v261 = vld [vmem:[#allocation7 + $0x38] sm:$0xf]
    %v262 = vld [vmem:[#allocation7 + $0x3c] sm:$0xf]
    %v263 = vld [vmem:[%s4] sm:$0x1]
    %v265 = vperm.slane %v263, 0
    %v283 = vunpack.c.l.b16 %v247
    %v284 = vunpack.c.l.b16 %v248
    %v285 = vunpack.c.l.b16 %v249
    %v286 = vunpack.c.l.b16 %v250
    %v287 = vunpack.c.l.b16 %v251
    %v288 = vunpack.c.l.b16 %v252
    %v289 = vunpack.c.l.b16 %v253
    %v290 = vunpack.c.l.b16 %v254
    %v291 = vunpack.c.l.b16 %v255
    %v292 = vunpack.c.l.b16 %v256
    %v293 = vunpack.c.l.b16 %v257
    %v294 = vunpack.c.l.b16 %v258
    %v295 = vunpack.c.l.b16 %v259
    %v296 = vunpack.c.l.b16 %v260
    %v297 = vunpack.c.l.b16 %v261
    %v298 = vunpack.c.l.b16 %v262
    %v299 = vpack.c.b16 %v284, %v283
    %v300 = vpack.c.b16 %v286, %v285
    %v301 = vpack.c.b16 %v288, %v287
    %v302 = vpack.c.b16 %v290, %v289
    %v303 = vpack.c.b16 %v292, %v291
    %v304 = vpack.c.b16 %v294, %v293
    %v305 = vpack.c.b16 %v296, %v295
    %v306 = vpack.c.b16 %v298, %v297
    %315 = vmatpush.bf16.msra.mxu0 %v306
    %316 = vmatpush.bf16.msra.mxu0 %v305
    %317 = vmatpush.bf16.msra.mxu0 %v304
    %318 = vmatpush.bf16.msra.mxu0 %v303
    %319 = vmatpush.bf16.msra.mxu0 %v302
    %320 = vmatpush.bf16.msra.mxu0 %v301
    %321 = vmatpush.bf16.msra.mxu0 %v300
    %322 = vmatpush.bf16.msra.mxu0 %v299
    %323 = vmatmul.bf16.gmra.mxu0 %v246
    %v324 = vpop.f32.mrf.mxu0
    %v325 = vadd.f32 %v265, %v324
    %v326 = vpop.f32.mrf.mxu0
    %v327 = vadd.f32 %v265, %v326
    %328 = vdwg.mxu0
    %v329 = vxor.u32 %v325, 2147483648
    %v330 = vxor.u32 %v327, 2147483648
    %v331 = vmul.f32 %v329, 1.442695
    %v332 = vpow.pop %v331
    %v333 = vmul.f32 %v330, 1.442695
    %v334 = vpow.pop %v333
    %v335 = vadd.f32 %v332, 1.0
    %v336 = vadd.f32 %v334, 1.0
    %v337 = vrcp.pop %v335
    %v338 = vmul.f32 %v335, %v337
    %v339 = vsub.f32 1.0, %v338
    %v340 = vmul.f32 %v337, %v339
    %v341 = vadd.f32 %v337, %v340
    %vm342 = vweird.f32 %v335
    %vm343 = vweird.f32 %v337
    %vm344 = vmor %vm342, %vm343
    %v345 = vsel %vm344, %v337, %v341
    %v346 = vand.u32 2147483647, %v335
    %vm347 = vcmp.eq.f32.partialorder %v346, 8.507059e+37
    %v348 = vand.u32 %v335, 2147483648
    %v349 = vor.u32 1.1754944e-38, %v348
    %v350 = vsel %vm347, %v349, %v345
    %v351 = vmul.f32 1.0, %v350
    %v352 = vrcp.pop %v336
    %v353 = vmul.f32 %v336, %v352
    %v354 = vsub.f32 1.0, %v353
    %v355 = vmul.f32 %v352, %v354
    %v356 = vadd.f32 %v352, %v355
    %vm357 = vweird.f32 %v336
    %vm358 = vweird.f32 %v352
    %vm359 = vmor %vm357, %vm358
    %v360 = vsel %vm359, %v352, %v356
    %v361 = vand.u32 2147483647, %v336
    %vm362 = vcmp.eq.f32.partialorder %v361, 8.507059e+37
    %v363 = vand.u32 %v336, 2147483648
    %v364 = vor.u32 1.1754944e-38, %v363
    %v365 = vsel %vm362, %v364, %v360
    %v366 = vmul.f32 1.0, %v365
    %367 = vst [vmem:[#allocation8] sm:$0xff] %v351
    %368 = vst [vmem:[#allocation8 + $0x8] sm:$0xff] %v366
    // Predicated region
    $region34: #{tpu_custom_call.1} parent=1 // pred_check
      _
    $region35: #{tpu_custom_call.1} parent=1 // pred_check_branch
      %370 = sbr.rel (0) target = $region37
    $region36: #{tpu_custom_call.1} parent=1 // pred_region
      %372 = vsyncadd [#allocation4], 0
      %s373 = sshll.u32 [#allocation8], 4
      %s374 = int_to_ptr.vmem [resolvable:$true] %s373
      %s375 = sshll.u32 %s5, 4
      %s376 = int_to_ptr.hbm [resolvable:$true] %s375
      %381 = dma.vmem_to_hbm [thread:$0]  %s374, 256, %s376, [#allocation4], 128, 128, 8
    $region37: #{tpu_custom_call.1} parent=1 // pred_fallthru
      _
    // Predicated region
    $region38: #{tpu_custom_call.1} parent=1 // pred_check
      _
    $region39: #{tpu_custom_call.1} parent=1 // pred_check_branch
      %383 = sbr.rel (0) target = $region41
    $region40: #{tpu_custom_call.1} parent=1 // pred_region
      %385 = dma.done [#allocation4], 256
    $region41: #{tpu_custom_call.1} parent=1 // pred_fallthru
      _
    %386 = vsyncpa [#allocation3], 1
    %387 = vsyncpa [#allocation6], 1
    %388 = vsyncpa [#allocation4], 1

</llo_original>
